<compile_context>
chip_gen: v6e
topology: v6e:2x2x1
jax: 0.10.0
libtpu: 0.0.40
codegen_flags: <defaults>
</compile_context>

<pallas_src>
import functools

import jax
import jax.numpy as jnp
from jax import lax
from jax.experimental import pallas as pl
from jax.experimental.pallas import tpu as pltpu

LN_EPS = 1e-5           # PyTorch nn.LayerNorm default eps
MAX_VALUE = 512.0       # ContinuousValueEncoder(max_value=512)


def _round_up(n, m):
    return ((n + m - 1) // m) * m


def _masked_layernorm(x, gamma, beta, valid, inv_d):
    """LayerNorm over the first `d` lanes of the last axis.

    x: (T, Dp) with the padded lanes [d:Dp) exactly zero.
    gamma/beta: (1, Dp), zero in the padded lanes (so padded outputs stay 0).
    valid: (1, Dp) f32 mask of the real lanes; inv_d = 1/d (Python float).
    """
    mean = jnp.sum(x, axis=-1, keepdims=True) * inv_d
    c = (x - mean) * valid
    var = jnp.sum(c * c, axis=-1, keepdims=True) * inv_d
    return c * lax.rsqrt(var + LN_EPS) * gamma + beta


def _encode_kernel(gid_ref, xval_ref, emb_ref, g_gamma_ref, g_beta_ref,
                   w1_ref, b1_ref, w2t_ref, b2_ref, x_gamma_ref, x_beta_ref,
                   out_ref, acc_ref, *, d_valid, v_tile):
    """Grid step (i, k): token slab i, embedding-table tile k.

    gid_ref   : (T, 1) int32   gene token ids for this token slab
    xval_ref  : (T, 1) f32     continuous values for this token slab
    emb_ref   : (Vt, Dp) bf16  embedding-table tile k
    g_*_ref   : (1, Dp) f32    GeneEncoder LayerNorm weight / bias (padded)
    w1/b1     : (1, Dp) f32    Linear(1, D) weight (as a row) and bias (padded)
    w2t       : (Dp, Dp) f32   Linear(D, D) weight, pre-transposed (h @ W2^T)
    b2        : (1, Dp) f32    Linear(D, D) bias (padded)
    x_*_ref   : (1, Dp) f32    ContinuousValueEncoder LayerNorm weight / bias
    out_ref   : (T, Dp)        total_embs slab (written at the last V tile)
    acc_ref   : (T, Dp) f32    scratch accumulator for the gathered embedding
    """
    k = pl.program_id(1)
    Dp = acc_ref.shape[1]

    @pl.when(k == 0)
    def _():
        acc_ref[...] = jnp.zeros_like(acc_ref)

    # ---- GeneEncoder gather (this V tile) via one-hot MXU matmul -----------
    ids = gid_ref[...]                                               # (T, 1)
    col = lax.broadcasted_iota(jnp.int32, (1, v_tile), 1) + k * v_tile
    onehot = (ids == col).astype(emb_ref.dtype)                      # (T, Vt)
    acc_ref[...] += jnp.dot(onehot, emb_ref[...],
                            preferred_element_type=jnp.float32)

    @pl.when(k == pl.num_programs(1) - 1)
    def _():
        valid = (lax.broadcasted_iota(jnp.int32, (1, Dp), 1)
                 < d_valid).astype(jnp.float32)
        inv_d = 1.0 / d_valid

        # GeneEncoder LayerNorm on the completed gather.
        g = _masked_layernorm(acc_ref[...], g_gamma_ref[...], g_beta_ref[...],
                              valid, inv_d)

        # ContinuousValueEncoder: clamp -> linear1 -> ReLU -> linear2 -> LN.
        xv = jnp.minimum(xval_ref[...], MAX_VALUE)                   # (T, 1)
        h = jnp.maximum(xv * w1_ref[...] + b1_ref[...], 0.0)         # (T, Dp)
        h = jnp.dot(h, w2t_ref[...],
                    preferred_element_type=jnp.float32,
                    precision=lax.Precision.HIGHEST) + b2_ref[...]   # (T, Dp)
        h = _masked_layernorm(h, x_gamma_ref[...], x_beta_ref[...],
                              valid, inv_d)
        # dropout: identity at inference.

        out_ref[...] = (g + h).astype(out_ref.dtype)


def _pad_to(a, shape):
    pads = [(0, s - d) for d, s in zip(a.shape, shape)]
    return jnp.pad(a, pads)


@functools.partial(jax.jit, static_argnames=("block_tokens", "v_block",
                                             "out_dtype", "table_dtype"))
def bioformer_encode_embs(g_tokens, x_values, params, *,
                          block_tokens=1024, v_block=2048,
                          out_dtype=jnp.float32, table_dtype=jnp.bfloat16):
    """g_tokens: (B, S) int; x_values: (B, S) float. Returns total_embs (B, S, D)."""
    B, S = g_tokens.shape
    V, D = params["emb_table"].shape
    N = B * S

    Dp = _round_up(D, 128)                   # lane-dense stores / full MXU lanes
    T = min(block_tokens, _round_up(N, 8))   # token-slab rows (multiple of 8)
    N_pad = _round_up(N, T)
    Vt = min(v_block, _round_up(V, 8))       # embedding-table tile rows
    V_pad = _round_up(V, Vt)

    gid = g_tokens.reshape(N).astype(jnp.int32)
    xval = x_values.reshape(N).astype(jnp.float32)
    if N_pad != N:
        gid = jnp.pad(gid, (0, N_pad - N))
        xval = jnp.pad(xval, (0, N_pad - N))
    gid = gid.reshape(N_pad, 1)
    xval = xval.reshape(N_pad, 1)

    # Pad the feature dim to Dp with zeros: padded lanes stay exactly zero
    # through gather / linear layers and are masked out of the LayerNorms.
    emb = _pad_to(params["emb_table"].astype(table_dtype), (V_pad, Dp))
    g_gamma = _pad_to(params["g_gamma"].reshape(1, D).astype(jnp.float32), (1, Dp))
    g_beta = _pad_to(params["g_beta"].reshape(1, D).astype(jnp.float32), (1, Dp))
    w1 = _pad_to(params["w1"].reshape(1, D).astype(jnp.float32), (1, Dp))
    b1 = _pad_to(params["b1"].reshape(1, D).astype(jnp.float32), (1, Dp))
    w2t = _pad_to(params["w2"].T.astype(jnp.float32), (Dp, Dp))  # y = h @ W^T + b
    b2 = _pad_to(params["b2"].reshape(1, D).astype(jnp.float32), (1, Dp))
    x_gamma = _pad_to(params["x_gamma"].reshape(1, D).astype(jnp.float32), (1, Dp))
    x_beta = _pad_to(params["x_beta"].reshape(1, D).astype(jnp.float32), (1, Dp))

    # Explicit VMEM budget (defaults are 16/32 MiB scoped — far below physical).
    tbl_it = jnp.dtype(table_dtype).itemsize
    out_it = jnp.dtype(out_dtype).itemsize
    vmem_bytes = (
        2 * Vt * Dp * tbl_it        # emb tile, double-buffered
        + T * Vt * 4                # one-hot / compare intermediate (rough)
        + Dp * Dp * 4               # w2t, single-buffered
        + 8 * Dp * 4                # LN params + w1/b1/b2 rows
        + 2 * T * Dp * out_it       # output slab, double-buffered
        + T * Dp * 4                # f32 gather accumulator scratch
        + 2 * 2 * T * 4             # gid/xval tiles
    )
    vmem_limit = int(min(128 * 1024 * 1024, 2 * vmem_bytes + (4 << 20)))

    def resident_spec(shape):
        # Fetched once (constant index_map); single-buffer to halve its VMEM.
        return pl.BlockSpec(shape, lambda i, k: (0, 0),
                            pipeline_mode=pl.Buffered(1))

    tok_spec = pl.BlockSpec((T, 1), lambda i, k: (i, 0))
    emb_spec = pl.BlockSpec((Vt, Dp), lambda i, k: (k, 0))   # streams over k
    out_spec = pl.BlockSpec((T, Dp), lambda i, k: (i, 0))

    out = pl.pallas_call(
        functools.partial(_encode_kernel, d_valid=D, v_tile=Vt),
        out_shape=jax.ShapeDtypeStruct((N_pad, Dp), out_dtype),
        grid=(N_pad // T, V_pad // Vt),
        in_specs=[
            tok_spec,                   # gene token ids
            tok_spec,                   # continuous values
            emb_spec,                   # embedding table tile (bf16)
            resident_spec((1, Dp)),     # GeneEncoder LN gamma
            resident_spec((1, Dp)),     # GeneEncoder LN beta
            resident_spec((1, Dp)),     # linear1 weight (row)
            resident_spec((1, Dp)),     # linear1 bias
            resident_spec((Dp, Dp)),    # linear2 weight (pre-transposed)
            resident_spec((1, Dp)),     # linear2 bias
            resident_spec((1, Dp)),     # CVE LN gamma
            resident_spec((1, Dp)),     # CVE LN beta
        ],
        out_specs=out_spec,
        scratch_shapes=[pltpu.VMEM((T, Dp), jnp.float32)],
        compiler_params=pltpu.CompilerParams(
            dimension_semantics=("parallel", "arbitrary"),
            vmem_limit_bytes=vmem_limit),
    )(gid, xval, emb, g_gamma, g_beta, w1, b1, w2t, b2, x_gamma, x_beta)

    return out[:N, :D].reshape(B, S, D)


# ----------------------------- pure-JAX reference -----------------------------

def _ln_ref(x, gamma, beta):
    mean = jnp.mean(x, axis=-1, keepdims=True)
    var = jnp.mean((x - mean) ** 2, axis=-1, keepdims=True)
    return (x - mean) * lax.rsqrt(var + LN_EPS) * gamma + beta


def _reference(g_tokens, x_values, params, table_dtype=jnp.bfloat16):
    # Mirror the kernel's table storage dtype (the kernel deliberately keeps
    # the embedding table in bf16; the one-hot gather selects rows exactly).
    tbl = params["emb_table"].astype(table_dtype).astype(jnp.float32)
    emb = tbl[g_tokens.astype(jnp.int32)]                             # (B, S, D)
    g = _ln_ref(emb, params["g_gamma"], params["g_beta"])

    xv = jnp.minimum(x_values.astype(jnp.float32), MAX_VALUE)[..., None]
    h = jax.nn.relu(xv * params["w1"] + params["b1"])
    h = jnp.einsum("bsd,ed->bse", h, params["w2"],
                   precision=lax.Precision.HIGHEST) + params["b2"]
    h = _ln_ref(h, params["x_gamma"], params["x_beta"])
    return g + h


if __name__ == "__main__":
    # Small, module-consistent shapes.
    ntoken = 64          # vocabulary size V
    d_model = 32         # D
    pad_idx = 0          # vocab['<pad>']
    batch, seq = 2, 8

    key = jax.random.PRNGKey(0)
    ks = jax.random.split(key, 7)

    # nn.Embedding init: N(0, 1); padding_idx row zeroed (forward semantics).
    emb_table = jax.random.normal(ks[0], (ntoken, d_model), dtype=jnp.float32)
    emb_table = emb_table.at[pad_idx].set(0.0)

    params = dict(
        emb_table=emb_table,
        # nn.LayerNorm init: weight=1, bias=0.
        g_gamma=jnp.ones((d_model,), jnp.float32),
        g_beta=jnp.zeros((d_model,), jnp.float32),
        # ContinuousValueEncoder weights (synthetic deterministic init).
        w1=0.1 * jax.random.normal(ks[1], (d_model,), jnp.float32),
        b1=0.1 * jax.random.normal(ks[2], (d_model,), jnp.float32),
        w2=0.1 * jax.random.normal(ks[3], (d_model, d_model), jnp.float32),
        b2=0.1 * jax.random.normal(ks[4], (d_model,), jnp.float32),
        x_gamma=jnp.ones((d_model,), jnp.float32),
        x_beta=jnp.zeros((d_model,), jnp.float32),
    )

    g_tokens = jax.random.randint(ks[5], (batch, seq), 0, ntoken, dtype=jnp.int32)
    # Values up to 600 so the clamp(max=512) path is exercised.
    x_values = jax.random.uniform(ks[6], (batch, seq), jnp.float32, 0.0, 600.0)

    ref = _reference(g_tokens, x_values, params)

    # Default tiling (single V tile / single token slab at these toy shapes).
    out = jax.block_until_ready(bioformer_encode_embs(g_tokens, x_values, params))
    assert out.shape == (batch, seq, d_model)
    assert jnp.allclose(out, ref, atol=1e-3, rtol=1e-3), "mismatch (default tiling)"

    # Small tiles: exercises the V-tiled accumulation and multiple token blocks.
    out_small = jax.block_until_ready(
        bioformer_encode_embs(g_tokens, x_values, params,
                              block_tokens=8, v_block=16))
    assert jnp.allclose(out_small, ref, atol=1e-3, rtol=1e-3), "mismatch (small tiles)"

    print("KERNEL_OK")
</pallas_src>

<mosaic_0001>
module attributes {stable_mosaic.version = 11 : i64} {
  func.func @_encode_kernel(%arg0: i32, %arg1: i32, %arg2: memref<16x1xi32, #tpu.memory_space<vmem>>, %arg3: memref<16x1xf32, #tpu.memory_space<vmem>>, %arg4: memref<64x128xbf16, #tpu.memory_space<vmem>>, %arg5: memref<1x128xf32, #tpu.memory_space<vmem>>, %arg6: memref<1x128xf32, #tpu.memory_space<vmem>>, %arg7: memref<1x128xf32, #tpu.memory_space<vmem>>, %arg8: memref<1x128xf32, #tpu.memory_space<vmem>>, %arg9: memref<128x128xf32, #tpu.memory_space<vmem>>, %arg10: memref<1x128xf32, #tpu.memory_space<vmem>>, %arg11: memref<1x128xf32, #tpu.memory_space<vmem>>, %arg12: memref<1x128xf32, #tpu.memory_space<vmem>>, %arg13: memref<16x128xf32, #tpu.memory_space<vmem>>, %arg14: memref<16x128xf32, #tpu.memory_space<vmem>>) attributes {dimension_semantics = [#tpu.dimension_semantics<parallel>, #tpu.dimension_semantics<arbitrary>], iteration_bounds = array<i64: 1, 1>, scalar_prefetch = 0 : i64, scratch_operands = 1 : i64, tpu.core_type = #tpu.core_type<tc>, window_params = [{transform_indices = @transform_0, window_bounds = array<i64: 16, 1>}, {transform_indices = @transform_1, window_bounds = array<i64: 16, 1>}, {transform_indices = @transform_2, window_bounds = array<i64: 64, 128>}, {pipeline_mode = #tpu.pipeline_mode<synchronous>, transform_indices = @transform_3, window_bounds = array<i64: 1, 128>}, {pipeline_mode = #tpu.pipeline_mode<synchronous>, transform_indices = @transform_4, window_bounds = array<i64: 1, 128>}, {pipeline_mode = #tpu.pipeline_mode<synchronous>, transform_indices = @transform_5, window_bounds = array<i64: 1, 128>}, {pipeline_mode = #tpu.pipeline_mode<synchronous>, transform_indices = @transform_6, window_bounds = array<i64: 1, 128>}, {pipeline_mode = #tpu.pipeline_mode<synchronous>, transform_indices = @transform_7, window_bounds = array<i64: 128, 128>}, {pipeline_mode = #tpu.pipeline_mode<synchronous>, transform_indices = @transform_8, window_bounds = array<i64: 1, 128>}, {pipeline_mode = #tpu.pipeline_mode<synchronous>, transform_indices = @transform_9, window_bounds = array<i64: 1, 128>}, {pipeline_mode = #tpu.pipeline_mode<synchronous>, transform_indices = @transform_10, window_bounds = array<i64: 1, 128>}, {transform_indices = @transform_11, window_bounds = array<i64: 16, 128>}]} {
    %c0_i32 = arith.constant 0 : i32
    %0 = arith.cmpi eq, %arg1, %c0_i32 : i32
    %1 = arith.extui %0 : i1 to i32
    %c0_i32_0 = arith.constant 0 : i32
    %2 = arith.cmpi ne, %1, %c0_i32_0 : i32
    scf.if %2 {
      %cst_10 = arith.constant 0.000000e+00 : f32
      %22 = vector.broadcast %cst_10 : f32 to vector<16x128xf32>
      %c0_11 = arith.constant 0 : index
      %c0_12 = arith.constant 0 : index
      %23 = vector.load %arg14[%c0_11, %c0_12] : memref<16x128xf32, #tpu.memory_space<vmem>>, vector<16x128xf32>
      tpu.vector_store %arg14[%c0_11, %c0_12], %22 {strides = array<i32>} : memref<16x128xf32, #tpu.memory_space<vmem>>, vector<16x128xf32>,
    } else {
    }
    %c0 = arith.constant 0 : index
    %c0_1 = arith.constant 0 : index
    %3 = vector.load %arg2[%c0, %c0_1] : memref<16x1xi32, #tpu.memory_space<vmem>>, vector<16x1xi32>
    %4 = tpu.iota {dimensions = array<i32: 1>} : vector<1x64xi32>
    %c64_i32 = arith.constant 64 : i32
    %5 = arith.muli %arg1, %c64_i32 : i32
    %6 = vector.broadcast %5 : i32 to vector<1x64xi32>
    %7 = arith.addi %4, %6 : vector<1x64xi32>
    %8 = vector.broadcast %3 : vector<16x1xi32> to vector<16x64xi32>
    %9 = vector.broadcast %7 : vector<1x64xi32> to vector<16x64xi32>
    %10 = arith.cmpi eq, %8, %9 : vector<16x64xi32>
    %11 = arith.extui %10 : vector<16x64xi1> to vector<16x64xi32>
    %12 = arith.sitofp %11 : vector<16x64xi32> to vector<16x64xf32>
    %13 = arith.truncf %12 : vector<16x64xf32> to vector<16x64xbf16>
    %c0_2 = arith.constant 0 : index
    %c0_3 = arith.constant 0 : index
    %14 = vector.load %arg14[%c0_2, %c0_3] : memref<16x128xf32, #tpu.memory_space<vmem>>, vector<16x128xf32>
    %c0_4 = arith.constant 0 : index
    %c0_5 = arith.constant 0 : index
    %15 = vector.load %arg4[%c0_4, %c0_5] : memref<64x128xbf16, #tpu.memory_space<vmem>>, vector<64x128xbf16>
    %cst = arith.constant dense<0.000000e+00> : vector<16x128xf32>
    %16 = tpu.matmul %13, %15, %cst {dimension_numbers = #tpu.dot_dimension_numbers<[1], [0], [0], [1], [0, 0, 1, 1], [], []>} : vector<16x64xbf16>, vector<64x128xbf16>, vector<16x128xf32> -> vector<16x128xf32>
    %17 = arith.addf %14, %16 : vector<16x128xf32>
    %c0_6 = arith.constant 0 : index
    %c0_7 = arith.constant 0 : index
    %18 = vector.load %arg14[%c0_6, %c0_7] : memref<16x128xf32, #tpu.memory_space<vmem>>, vector<16x128xf32>
    tpu.vector_store %arg14[%c0_6, %c0_7], %17 {strides = array<i32>} : memref<16x128xf32, #tpu.memory_space<vmem>>, vector<16x128xf32>,
    %c0_i32_8 = arith.constant 0 : i32
    %19 = arith.cmpi eq, %arg1, %c0_i32_8 : i32
    %20 = arith.extui %19 : i1 to i32
    %c0_i32_9 = arith.constant 0 : i32
    %21 = arith.cmpi ne, %20, %c0_i32_9 : i32
    scf.if %21 {
      %22 = tpu.iota {dimensions = array<i32: 1>} : vector<1x128xi32>
      %c32_i32 = arith.constant 32 : i32
      %23 = vector.broadcast %c32_i32 : i32 to vector<1x128xi32>
      %24 = arith.cmpi slt, %22, %23 : vector<1x128xi32>
      %25 = arith.extui %24 : vector<1x128xi1> to vector<1x128xi32>
      %26 = arith.sitofp %25 : vector<1x128xi32> to vector<1x128xf32>
      %c0_10 = arith.constant 0 : index
      %c0_11 = arith.constant 0 : index
      %27 = vector.load %arg14[%c0_10, %c0_11] : memref<16x128xf32, #tpu.memory_space<vmem>>, vector<16x128xf32>
      %c0_12 = arith.constant 0 : index
      %c0_13 = arith.constant 0 : index
      %28 = vector.load %arg5[%c0_12, %c0_13] : memref<1x128xf32, #tpu.memory_space<vmem>>, vector<1x128xf32>
      %c0_14 = arith.constant 0 : index
      %c0_15 = arith.constant 0 : index
      %29 = vector.load %arg6[%c0_14, %c0_15] : memref<1x128xf32, #tpu.memory_space<vmem>>, vector<1x128xf32>
      %cst_16 = arith.constant dense<0.000000e+00> : vector<16xf32>
      %30 = vector.multi_reduction <add>, %27, %cst_16 [1] : vector<16x128xf32> to vector<16xf32>
      %31 = vector.shape_cast %30 : vector<16xf32> to vector<16x1xf32>
      %cst_17 = arith.constant 3.125000e-02 : f32
      %32 = vector.broadcast %cst_17 : f32 to vector<16x1xf32>
      %33 = arith.mulf %31, %32 : vector<16x1xf32>
      %34 = vector.broadcast %33 : vector<16x1xf32> to vector<16x128xf32>
      %35 = arith.subf %27, %34 : vector<16x128xf32>
      %36 = vector.broadcast %26 : vector<1x128xf32> to vector<16x128xf32>
      %37 = arith.mulf %35, %36 : vector<16x128xf32>
      %38 = arith.mulf %37, %37 : vector<16x128xf32>
      %cst_18 = arith.constant dense<0.000000e+00> : vector<16xf32>
      %39 = vector.multi_reduction <add>, %38, %cst_18 [1] : vector<16x128xf32> to vector<16xf32>
      %40 = vector.shape_cast %39 : vector<16xf32> to vector<16x1xf32>
      %cst_19 = arith.constant 3.125000e-02 : f32
      %41 = vector.broadcast %cst_19 : f32 to vector<16x1xf32>
      %42 = arith.mulf %40, %41 : vector<16x1xf32>
      %cst_20 = arith.constant 9.99999974E-6 : f32
      %43 = vector.broadcast %cst_20 : f32 to vector<16x1xf32>
      %44 = arith.addf %42, %43 : vector<16x1xf32>
      %45 = math.rsqrt %44 : vector<16x1xf32>
      %46 = vector.broadcast %45 : vector<16x1xf32> to vector<16x128xf32>
      %47 = arith.mulf %37, %46 : vector<16x128xf32>
      %48 = vector.broadcast %28 : vector<1x128xf32> to vector<16x128xf32>
      %49 = arith.mulf %47, %48 : vector<16x128xf32>
      %50 = vector.broadcast %29 : vector<1x128xf32> to vector<16x128xf32>
      %51 = arith.addf %49, %50 : vector<16x128xf32>
      %c0_21 = arith.constant 0 : index
      %c0_22 = arith.constant 0 : index
      %52 = vector.load %arg3[%c0_21, %c0_22] : memref<16x1xf32, #tpu.memory_space<vmem>>, vector<16x1xf32>
      %cst_23 = arith.constant 5.120000e+02 : f32
      %53 = vector.broadcast %cst_23 : f32 to vector<16x1xf32>
      %54 = arith.minimumf %52, %53 : vector<16x1xf32>
      %c0_24 = arith.constant 0 : index
      %c0_25 = arith.constant 0 : index
      %55 = vector.load %arg7[%c0_24, %c0_25] : memref<1x128xf32, #tpu.memory_space<vmem>>, vector<1x128xf32>
      %56 = vector.broadcast %54 : vector<16x1xf32> to vector<16x128xf32>
      %57 = vector.broadcast %55 : vector<1x128xf32> to vector<16x128xf32>
      %58 = arith.mulf %56, %57 : vector<16x128xf32>
      %c0_26 = arith.constant 0 : index
      %c0_27 = arith.constant 0 : index
      %59 = vector.load %arg8[%c0_26, %c0_27] : memref<1x128xf32, #tpu.memory_space<vmem>>, vector<1x128xf32>
      %60 = vector.broadcast %59 : vector<1x128xf32> to vector<16x128xf32>
      %61 = arith.addf %58, %60 : vector<16x128xf32>
      %cst_28 = arith.constant 0.000000e+00 : f32
      %62 = vector.broadcast %cst_28 : f32 to vector<16x128xf32>
      %63 = arith.maximumf %61, %62 : vector<16x128xf32>
      %c0_29 = arith.constant 0 : index
      %c0_30 = arith.constant 0 : index
      %64 = vector.load %arg9[%c0_29, %c0_30] : memref<128x128xf32, #tpu.memory_space<vmem>>, vector<128x128xf32>
      %cst_31 = arith.constant dense<0.000000e+00> : vector<16x128xf32>
      %65 = tpu.matmul %63, %64, %cst_31 {dimension_numbers = #tpu.dot_dimension_numbers<[1], [0], [0], [1], [0, 0, 1, 1], [], []>, precision = #tpu.contract_precision<fp32>} : vector<16x128xf32>, vector<128x128xf32>, vector<16x128xf32> -> vector<16x128xf32>
      %c0_32 = arith.constant 0 : index
      %c0_33 = arith.constant 0 : index
      %66 = vector.load %arg10[%c0_32, %c0_33] : memref<1x128xf32, #tpu.memory_space<vmem>>, vector<1x128xf32>
      %67 = vector.broadcast %66 : vector<1x128xf32> to vector<16x128xf32>
      %68 = arith.addf %65, %67 : vector<16x128xf32>
      %c0_34 = arith.constant 0 : index
      %c0_35 = arith.constant 0 : index
      %69 = vector.load %arg11[%c0_34, %c0_35] : memref<1x128xf32, #tpu.memory_space<vmem>>, vector<1x128xf32>
      %c0_36 = arith.constant 0 : index
      %c0_37 = arith.constant 0 : index
      %70 = vector.load %arg12[%c0_36, %c0_37] : memref<1x128xf32, #tpu.memory_space<vmem>>, vector<1x128xf32>
      %cst_38 = arith.constant dense<0.000000e+00> : vector<16xf32>
      %71 = vector.multi_reduction <add>, %68, %cst_38 [1] : vector<16x128xf32> to vector<16xf32>
      %72 = vector.shape_cast %71 : vector<16xf32> to vector<16x1xf32>
      %cst_39 = arith.constant 3.125000e-02 : f32
      %73 = vector.broadcast %cst_39 : f32 to vector<16x1xf32>
      %74 = arith.mulf %72, %73 : vector<16x1xf32>
      %75 = vector.broadcast %74 : vector<16x1xf32> to vector<16x128xf32>
      %76 = arith.subf %68, %75 : vector<16x128xf32>
      %77 = vector.broadcast %26 : vector<1x128xf32> to vector<16x128xf32>
      %78 = arith.mulf %76, %77 : vector<16x128xf32>
      %79 = arith.mulf %78, %78 : vector<16x128xf32>
      %cst_40 = arith.constant dense<0.000000e+00> : vector<16xf32>
      %80 = vector.multi_reduction <add>, %79, %cst_40 [1] : vector<16x128xf32> to vector<16xf32>
      %81 = vector.shape_cast %80 : vector<16xf32> to vector<16x1xf32>
      %cst_41 = arith.constant 3.125000e-02 : f32
      %82 = vector.broadcast %cst_41 : f32 to vector<16x1xf32>
      %83 = arith.mulf %81, %82 : vector<16x1xf32>
      %cst_42 = arith.constant 9.99999974E-6 : f32
      %84 = vector.broadcast %cst_42 : f32 to vector<16x1xf32>
      %85 = arith.addf %83, %84 : vector<16x1xf32>
      %86 = math.rsqrt %85 : vector<16x1xf32>
      %87 = vector.broadcast %86 : vector<16x1xf32> to vector<16x128xf32>
      %88 = arith.mulf %78, %87 : vector<16x128xf32>
      %89 = vector.broadcast %69 : vector<1x128xf32> to vector<16x128xf32>
      %90 = arith.mulf %88, %89 : vector<16x128xf32>
      %91 = vector.broadcast %70 : vector<1x128xf32> to vector<16x128xf32>
      %92 = arith.addf %90, %91 : vector<16x128xf32>
      %93 = arith.addf %51, %92 : vector<16x128xf32>
      %c0_43 = arith.constant 0 : index
      %c0_44 = arith.constant 0 : index
      %94 = vector.load %arg13[%c0_43, %c0_44] : memref<16x128xf32, #tpu.memory_space<vmem>>, vector<16x128xf32>
      tpu.vector_store %arg13[%c0_43, %c0_44], %93 {strides = array<i32>} : memref<16x128xf32, #tpu.memory_space<vmem>>, vector<16x128xf32>,
    } else {
    }
    return
  }
  func.func @transform_0(%arg0: i32, %arg1: i32) -> (i32, i32) {
    %c0_i32 = arith.constant 0 : i32
    %c0_i32_0 = arith.constant 0 : i32
    return %arg0, %c0_i32 : i32, i32
  }
  func.func @transform_1(%arg0: i32, %arg1: i32) -> (i32, i32) {
    %c0_i32 = arith.constant 0 : i32
    %c0_i32_0 = arith.constant 0 : i32
    return %arg0, %c0_i32 : i32, i32
  }
  func.func @transform_2(%arg0: i32, %arg1: i32) -> (i32, i32) {
    %c0_i32 = arith.constant 0 : i32
    %c0_i32_0 = arith.constant 0 : i32
    return %arg1, %c0_i32 : i32, i32
  }
  func.func @transform_3(%arg0: i32, %arg1: i32) -> (i32, i32) {
    %c0_i32 = arith.constant 0 : i32
    %c0_i32_0 = arith.constant 0 : i32
    %c0_i32_1 = arith.constant 0 : i32
    return %c0_i32, %c0_i32_0 : i32, i32
  }
  func.func @transform_4(%arg0: i32, %arg1: i32) -> (i32, i32) {
    %c0_i32 = arith.constant 0 : i32
    %c0_i32_0 = arith.constant 0 : i32
    %c0_i32_1 = arith.constant 0 : i32
    return %c0_i32, %c0_i32_0 : i32, i32
  }
  func.func @transform_5(%arg0: i32, %arg1: i32) -> (i32, i32) {
    %c0_i32 = arith.constant 0 : i32
    %c0_i32_0 = arith.constant 0 : i32
    %c0_i32_1 = arith.constant 0 : i32
    return %c0_i32, %c0_i32_0 : i32, i32
  }
  func.func @transform_6(%arg0: i32, %arg1: i32) -> (i32, i32) {
    %c0_i32 = arith.constant 0 : i32
    %c0_i32_0 = arith.constant 0 : i32
    %c0_i32_1 = arith.constant 0 : i32
    return %c0_i32, %c0_i32_0 : i32, i32
  }
  func.func @transform_7(%arg0: i32, %arg1: i32) -> (i32, i32) {
    %c0_i32 = arith.constant 0 : i32
    %c0_i32_0 = arith.constant 0 : i32
    %c0_i32_1 = arith.constant 0 : i32
    return %c0_i32, %c0_i32_0 : i32, i32
  }
  func.func @transform_8(%arg0: i32, %arg1: i32) -> (i32, i32) {
    %c0_i32 = arith.constant 0 : i32
    %c0_i32_0 = arith.constant 0 : i32
    %c0_i32_1 = arith.constant 0 : i32
    return %c0_i32, %c0_i32_0 : i32, i32
  }
  func.func @transform_9(%arg0: i32, %arg1: i32) -> (i32, i32) {
    %c0_i32 = arith.constant 0 : i32
    %c0_i32_0 = arith.constant 0 : i32
    %c0_i32_1 = arith.constant 0 : i32
    return %c0_i32, %c0_i32_0 : i32, i32
  }
  func.func @transform_10(%arg0: i32, %arg1: i32) -> (i32, i32) {
    %c0_i32 = arith.constant 0 : i32
    %c0_i32_0 = arith.constant 0 : i32
    %c0_i32_1 = arith.constant 0 : i32
    return %c0_i32, %c0_i32_0 : i32, i32
  }
  func.func @transform_11(%arg0: i32, %arg1: i32) -> (i32, i32) {
    %c0_i32 = arith.constant 0 : i32
    %c0_i32_0 = arith.constant 0 : i32
    return %arg0, %c0_i32 : i32, i32
  }
}

</mosaic_0001>

<llo_original>
// kernel: bioformer_encode_embs.1
$region0: #{bioformer_encode_embs.1}
  #allocation0 [shape = 'u32[]', space=smem, size = 0x4, offset = 0x4, fixed_abs, tag = 'smem constant byte address 0x4 - core index']
  #allocation1 [shape = 'u32[144,128]{1,0:T(1,128)}', space=vmem, size = 0x12000, scoped, tag = 'internal scratch']
  #allocation2 [shape = 'f32[16,128]{1,0:T(8,128)}', space=vmem, size = 0x2000, scoped, tag = 'scratch operand']
  %s0 = inlined_call_operand.vmem [shape: s32[16,1], index: 0, kind: input, shape index: {}]
  %s1 = inlined_call_operand.vmem [shape: f32[16,1], index: 1, kind: input, shape index: {}]
  %s2 = inlined_call_operand.vmem [shape: bf16[64,128], index: 2, kind: input, shape index: {}]
  %s3 = inlined_call_operand.vmem [shape: f32[1,128], index: 3, kind: input, shape index: {}]
  %s4 = inlined_call_operand.vmem [shape: f32[1,128], index: 4, kind: input, shape index: {}]
  %s5 = inlined_call_operand.vmem [shape: f32[1,128], index: 5, kind: input, shape index: {}]
  %s6 = inlined_call_operand.vmem [shape: f32[1,128], index: 6, kind: input, shape index: {}]
  %s7 = inlined_call_operand.vmem [shape: f32[128,128], index: 7, kind: input, shape index: {}]
  %s8 = inlined_call_operand.vmem [shape: f32[1,128], index: 8, kind: input, shape index: {}]
  %s9 = inlined_call_operand.vmem [shape: f32[1,128], index: 9, kind: input, shape index: {}]
  %s10 = inlined_call_operand.vmem [shape: f32[1,128], index: 10, kind: input, shape index: {}]
  %s11 = inlined_call_operand.vmem [shape: f32[16,128], index: 11, kind: output, shape index: {}]
  %s12 = sld [smem:[#allocation0]]
  $region62: #{bioformer_encode_embs.1} parent=0
    _
  %s14 = ssub.s32 1, %s12
  %s15 = scalar_select 0, %s14, %s12
  // Predicated region
  $region2: #{bioformer_encode_embs.1} parent=0 // pred_check
    _
  $region3: #{bioformer_encode_embs.1} parent=0 // pred_check_branch
    %17 = sbr.rel (0) target = $region5
  $region4: #{bioformer_encode_embs.1} parent=0 // pred_region
    _
  $region5: #{bioformer_encode_embs.1} parent=0 // pred_fallthru
    _
  // Predicated region
  $region6: #{bioformer_encode_embs.1} parent=0 // pred_check
    _
  $region7: #{bioformer_encode_embs.1} parent=0 // pred_check_branch
    %19 = sbr.rel (0) target = $region9
  $region8: #{bioformer_encode_embs.1} parent=0 // pred_region
    _
  $region9: #{bioformer_encode_embs.1} parent=0 // pred_fallthru
    _
  // Predicated region
  $region10: #{bioformer_encode_embs.1} parent=0 // pred_check
    _
  $region11: #{bioformer_encode_embs.1} parent=0 // pred_check_branch
    %21 = sbr.rel (0) target = $region13
  $region12: #{bioformer_encode_embs.1} parent=0 // pred_region
    _
  $region13: #{bioformer_encode_embs.1} parent=0 // pred_fallthru
    _
  // Predicated region
  $region14: #{bioformer_encode_embs.1} parent=0 // pred_check
    _
  $region15: #{bioformer_encode_embs.1} parent=0 // pred_check_branch
    %23 = sbr.rel (0) target = $region17
  $region16: #{bioformer_encode_embs.1} parent=0 // pred_region
    _
  $region17: #{bioformer_encode_embs.1} parent=0 // pred_fallthru
    _
  // Predicated region
  $region18: #{bioformer_encode_embs.1} parent=0 // pred_check
    _
  $region19: #{bioformer_encode_embs.1} parent=0 // pred_check_branch
    %25 = sbr.rel (0) target = $region21
  $region20: #{bioformer_encode_embs.1} parent=0 // pred_region
    _
  $region21: #{bioformer_encode_embs.1} parent=0 // pred_fallthru
    _
  // Predicated region
  $region22: #{bioformer_encode_embs.1} parent=0 // pred_check
    _
  $region23: #{bioformer_encode_embs.1} parent=0 // pred_check_branch
    %27 = sbr.rel (0) target = $region25
  $region24: #{bioformer_encode_embs.1} parent=0 // pred_region
    _
  $region25: #{bioformer_encode_embs.1} parent=0 // pred_fallthru
    _
  // Predicated region
  $region26: #{bioformer_encode_embs.1} parent=0 // pred_check
    _
  $region27: #{bioformer_encode_embs.1} parent=0 // pred_check_branch
    %29 = sbr.rel (0) target = $region29
  $region28: #{bioformer_encode_embs.1} parent=0 // pred_region
    _
  $region29: #{bioformer_encode_embs.1} parent=0 // pred_fallthru
    _
  // Predicated region
  $region30: #{bioformer_encode_embs.1} parent=0 // pred_check
    _
  $region31: #{bioformer_encode_embs.1} parent=0 // pred_check_branch
    %31 = sbr.rel (0) target = $region33
  $region32: #{bioformer_encode_embs.1} parent=0 // pred_region
    _
  $region33: #{bioformer_encode_embs.1} parent=0 // pred_fallthru
    _
  // Predicated region
  $region34: #{bioformer_encode_embs.1} parent=0 // pred_check
    _
  $region35: #{bioformer_encode_embs.1} parent=0 // pred_check_branch
    %33 = sbr.rel (0) target = $region37
  $region36: #{bioformer_encode_embs.1} parent=0 // pred_region
    _
  $region37: #{bioformer_encode_embs.1} parent=0 // pred_fallthru
    _
  // Predicated region
  $region38: #{bioformer_encode_embs.1} parent=0 // pred_check
    _
  $region39: #{bioformer_encode_embs.1} parent=0 // pred_check_branch
    %35 = sbr.rel (0) target = $region41
  $region40: #{bioformer_encode_embs.1} parent=0 // pred_region
    _
  $region41: #{bioformer_encode_embs.1} parent=0 // pred_fallthru
    _
  // Predicated region
  $region42: #{bioformer_encode_embs.1} parent=0 // pred_check
    _
  $region43: #{bioformer_encode_embs.1} parent=0 // pred_check_branch
    %37 = sbr.rel (0) target = $region45
  $region44: #{bioformer_encode_embs.1} parent=0 // pred_region
    _
  $region45: #{bioformer_encode_embs.1} parent=0 // pred_fallthru
    _
  %p39 = scmp.eq.s32.totalorder 0, 0
  // Predicated region
  $region46: #{bioformer_encode_embs.1} parent=0 // pred_check
    %p40 = pneg %p39
  $region47: #{bioformer_encode_embs.1} parent=0 // pred_check_branch
    %42 = sbr.rel (%p40) target = $region49
  $region48: #{bioformer_encode_embs.1} parent=0 // pred_region
    %43 = vst [vmem:[#allocation2] sm:$0xff] 0.0
    %44 = vst [vmem:[#allocation2 + $0x8] sm:$0xff] 0.0
  $region49: #{bioformer_encode_embs.1} parent=0 // pred_fallthru
    _
  %v45 = vld [vmem:[%s0] sm:$0xff]
  %v46 = vld [vmem:[%s0 + $0x8] sm:$0xff]
  %v47 = vlaneseq
  %v48 = vand.u32 %v47, 127
  %s49 = smul.u32 0, 64
  %v50 = vstv %s49
  %v51 = vadd.s32 %v48, %v50
  %52 = vset.pattern.permute.xlu0 0
  %53 = vperm.xlu0 %52, %v45
  %v54 = vpop.permute.xlu0 %53
  %55 = vset.pattern.permute.xlu0 0
  %56 = vperm.xlu0 %55, %v46
  %v57 = vpop.permute.xlu0 %56
  %vm58 = vcmp.eq.s32.totalorder %v54, %v51
  %vm59 = vcmp.eq.s32.totalorder %v57, %v51
  %v60 = vsel %vm58, 1, 0
  %v61 = vsel %vm59, 1, 0
  %v62 = vcvt.s32.f32 %v60
  %v63 = vcvt.s32.f32 %v61
  %v64 = vpack.c.bf16 %v63, %v62
  %v65 = vld [vmem:[#allocation2] sm:$0xff]
  %v66 = vld [vmem:[#allocation2 + $0x8] sm:$0xff]
  %v67 = vld [vmem:[%s2] sm:$0xf]
  %v68 = vld [vmem:[%s2 + $0x4] sm:$0xf]
  %v69 = vld [vmem:[%s2 + $0x8] sm:$0xf]
  %v70 = vld [vmem:[%s2 + $0xc] sm:$0xf]
  %v71 = vld [vmem:[%s2 + $0x10] sm:$0xf]
  %v72 = vld [vmem:[%s2 + $0x14] sm:$0xf]
  %v73 = vld [vmem:[%s2 + $0x18] sm:$0xf]
  %v74 = vld [vmem:[%s2 + $0x1c] sm:$0xf]
  %v83 = vunpack.c.l.b16 %v67
  %v84 = vunpack.c.l.b16 %v68
  %v85 = vunpack.c.l.b16 %v69
  %v86 = vunpack.c.l.b16 %v70
  %v87 = vunpack.c.l.b16 %v71
  %v88 = vunpack.c.l.b16 %v72
  %v89 = vunpack.c.l.b16 %v73
  %v90 = vunpack.c.l.b16 %v74
  %v91 = vpack.c.b16 %v84, %v83
  %v92 = vpack.c.b16 %v86, %v85
  %v93 = vpack.c.b16 %v88, %v87
  %v94 = vpack.c.b16 %v90, %v89
  %vm99 = vcmask 523264
  %v101 = vsel %vm99, %v64, 0
  %103 = vmatprep.subr.bf16.mxu0 0
  %104 = vmatpush1.bf16.msra.mxu0 0
  %105 = vmatprep.subr.bf16.mxu0 0
  %106 = vmatpush1.bf16.msra.mxu0 0
  %107 = vmatprep.subr.bf16.mxu0 0
  %108 = vmatpush1.bf16.msra.mxu0 0
  %109 = vmatprep.subr.bf16.mxu0 0
  %110 = vmatpush1.bf16.msra.mxu0 0
  %111 = vmatprep.subr.bf16.mxu0 0
  %112 = vmatpush1.bf16.msra.mxu0 %v94
  %113 = vmatprep.subr.bf16.mxu0 0
  %114 = vmatpush1.bf16.msra.mxu0 %v93
  %115 = vmatprep.subr.bf16.mxu0 0
  %116 = vmatpush1.bf16.msra.mxu0 %v92
  %117 = vmatprep.subr.bf16.mxu0 0
  %118 = vmatpush1.bf16.msra.mxu0 %v91
  %119 = vmatprep.subr.bf16.mxu0 0
  %120 = vmatpush2.bf16.msra.mxu0 0
  %121 = vmatprep.subr.bf16.mxu0 0
  %122 = vmatpush2.bf16.msra.mxu0 0
  %123 = vmatprep.subr.bf16.mxu0 0
  %124 = vmatpush2.bf16.msra.mxu0 0
  %125 = vmatprep.subr.bf16.mxu0 0
  %126 = vmatpush2.bf16.msra.mxu0 0
  %127 = vmatprep.subr.bf16.mxu0 0
  %128 = vmatpush2.bf16.msra.mxu0 0
  %129 = vmatprep.subr.bf16.mxu0 0
  %130 = vmatpush2.bf16.msra.mxu0 0
  %131 = vmatprep.subr.bf16.mxu0 0
  %132 = vmatpush2.bf16.msra.mxu0 0
  %133 = vmatprep.subr.bf16.mxu0 0
  %134 = vmatpush2.bf16.msra.mxu0 0
  %135 = vmatprep.mubr.bf16.mxu0 0
  %136 = vmatmul.mubr.bf16.gmra.mxu0 %v101
  %v137 = vpop.f32.mrf.mxu0
  %v138 = vadd.f32 0.0, %v137
  %v139 = vpop.f32.mrf.mxu0
  %v140 = vpop.f32.mrf.mxu0
  %v141 = vadd.f32 0.0, %v140
  %v142 = vpop.f32.mrf.mxu0
  %143 = vdwg.mxu0
  %v144 = vadd.f32 %v65, %v138
  %v145 = vadd.f32 %v66, %v141
  %146 = vst [vmem:[#allocation2] sm:$0xff] %v144
  %147 = vst [vmem:[#allocation2 + $0x8] sm:$0xff] %v145
  // Predicated region
  $region50: #{bioformer_encode_embs.1} parent=0 // pred_check
    %p148 = pneg %p39
  $region51: #{bioformer_encode_embs.1} parent=0 // pred_check_branch
    %150 = sbr.rel (%p148) target = $region53
  $region52: #{bioformer_encode_embs.1} parent=0 // pred_region
    %vm151 = vcmp.lt.s32.totalorder %v48, 32
    %v152 = vsel %vm151, 1, 0
    %v153 = vcvt.s32.f32 %v152
    %v154 = vld [vmem:[#allocation2] sm:$0xff]
    %v155 = vld [vmem:[#allocation2 + $0x8] sm:$0xff]
    %v156 = vld [vmem:[%s3] sm:$0x1]
    %v157 = vld [vmem:[%s4] sm:$0x1]
    %158 = vadd.xlane.f32.xlu0 %v154
    %v159 = vpop.xlane.xlu0 %158
    %160 = vadd.xlane.f32.xlu0 %v155
    %v161 = vpop.xlane.xlu0 %160
    %v162 = vmul.f32 %v159, 0.03125
    %v163 = vmul.f32 %v161, 0.03125
    %v164 = vsub.f32 %v154, %v162
    %v165 = vsub.f32 %v155, %v163
    %v166 = vmul.f32 %v164, %v153
    %v167 = vmul.f32 %v165, %v153
    %v168 = vmul.f32 %v166, %v166
    %v169 = vmul.f32 %v167, %v167
    %170 = vadd.xlane.f32.xlu0 %v168
    %v171 = vpop.xlane.xlu0 %170
    %172 = vadd.xlane.f32.xlu0 %v169
    %v173 = vpop.xlane.xlu0 %172
    %v174 = vmul.f32 %v171, 0.03125
    %v175 = vmul.f32 %v173, 0.03125
    %v176 = vadd.f32 %v174, 1e-05
    %v177 = vadd.f32 %v175, 1e-05
    %v178 = vrsqrt.pop %v176
    %v179 = vrsqrt.pop %v177
    %v180 = vmul.f32 %v166, %v178
    %v181 = vmul.f32 %v167, %v179
    %v183 = vlaneseq
    %v184 = vshrl.u32 %v183, 7
    %v185 = vsub.s32 0, %v184
    %v186 = vrot.slane %v156, %v185
    %v188 = vmul.f32 %v180, %v186
    %v189 = vmul.f32 %v181, %v186
    %v191 = vlaneseq
    %v192 = vshrl.u32 %v191, 7
    %v193 = vsub.s32 0, %v192
    %v194 = vrot.slane %v157, %v193
    %v196 = vadd.f32 %v188, %v194
    %v197 = vadd.f32 %v189, %v194
    %v198 = vld [vmem:[%s1] sm:$0xff]
    %v199 = vld [vmem:[%s1 + $0x8] sm:$0xff]
    %v200 = vmin.f32 %v198, 512.0
    %v201 = vmin.f32 %v199, 512.0
    %v202 = vld [vmem:[%s5] sm:$0x1]
    %204 = vset.pattern.permute.xlu0 0
    %205 = vperm.xlu0 %204, %v200
    %v206 = vpop.permute.xlu0 %205
    %209 = vset.pattern.permute.xlu0 0
    %210 = vperm.xlu0 %209, %v201
    %v211 = vpop.permute.xlu0 %210
    %v214 = vlaneseq
    %v215 = vshrl.u32 %v214, 7
    %v216 = vsub.s32 0, %v215
    %v217 = vrot.slane %v202, %v216
    %v219 = vmul.f32 %v206, %v217
    %v220 = vmul.f32 %v211, %v217
    %v221 = vld [vmem:[%s6] sm:$0x1]
    %v223 = vlaneseq
    %v224 = vshrl.u32 %v223, 7
    %v225 = vsub.s32 0, %v224
    %v226 = vrot.slane %v221, %v225
    %v228 = vadd.f32 %v219, %v226
    %v229 = vadd.f32 %v220, %v226
    %v230 = vmax.f32 %v228, 0.0
    %v231 = vmax.f32 %v229, 0.0
    %v232 = vld [vmem:[%s7] sm:$0xff]
    %v233 = vld [vmem:[%s7 + $0x8] sm:$0xff]
    %v234 = vld [vmem:[%s7 + $0x10] sm:$0xff]
    %v235 = vld [vmem:[%s7 + $0x18] sm:$0xff]
    %v236 = vld [vmem:[%s7 + $0x20] sm:$0xff]
    %v237 = vld [vmem:[%s7 + $0x28] sm:$0xff]
    %v238 = vld [vmem:[%s7 + $0x30] sm:$0xff]
    %v239 = vld [vmem:[%s7 + $0x38] sm:$0xff]
    %v240 = vld [vmem:[%s7 + $0x40] sm:$0xff]
    %v241 = vld [vmem:[%s7 + $0x48] sm:$0xff]
    %v242 = vld [vmem:[%s7 + $0x50] sm:$0xff]
    %v243 = vld [vmem:[%s7 + $0x58] sm:$0xff]
    %v244 = vld [vmem:[%s7 + $0x60] sm:$0xff]
    %v245 = vld [vmem:[%s7 + $0x68] sm:$0xff]
    %v246 = vld [vmem:[%s7 + $0x70] sm:$0xff]
    %v247 = vld [vmem:[%s7 + $0x78] sm:$0xff]
    %v248 = vld [vmem:[%s8] sm:$0x1]
    %v250 = vlaneseq
    %v251 = vshrl.u32 %v250, 7
    %v252 = vsub.s32 0, %v251
    %v253 = vrot.slane %v248, %v252
    %255 = vmatprep.subr.mxu0 0.0
    %v256 = vand.u32 %v247, 4294901760
    %257 = vmatpush1.msra.mxu0 %v256
    %258 = vmatprep.subr.mxu0 0.0
    %v259 = vand.u32 %v246, 4294901760
    %260 = vmatpush1.msra.mxu0 %v259
    %261 = vmatprep.subr.mxu0 0.0
    %v262 = vand.u32 %v245, 4294901760
    %263 = vmatpush1.msra.mxu0 %v262
    %264 = vmatprep.subr.mxu0 0.0
    %v265 = vand.u32 %v244, 4294901760
    %266 = vmatpush1.msra.mxu0 %v265
    %267 = vmatprep.subr.mxu0 0.0
    %v268 = vand.u32 %v243, 4294901760
    %269 = vmatpush1.msra.mxu0 %v268
    %270 = vmatprep.subr.mxu0 0.0
    %v271 = vand.u32 %v242, 4294901760
    %272 = vmatpush1.msra.mxu0 %v271
    %273 = vmatprep.subr.mxu0 0.0
    %v274 = vand.u32 %v241, 4294901760
    %275 = vmatpush1.msra.mxu0 %v274
    %276 = vmatprep.subr.mxu0 0.0
    %v277 = vand.u32 %v240, 4294901760
    %278 = vmatpush1.msra.mxu0 %v277
    %279 = vmatprep.subr.mxu0 0.0
    %v280 = vand.u32 %v239, 4294901760
    %281 = vmatpush1.msra.mxu0 %v280
    %282 = vmatprep.subr.mxu0 0.0
    %v283 = vand.u32 %v238, 4294901760
    %284 = vmatpush1.msra.mxu0 %v283
    %285 = vmatprep.subr.mxu0 0.0
    %v286 = vand.u32 %v237, 4294901760
    %287 = vmatpush1.msra.mxu0 %v286
    %288 = vmatprep.subr.mxu0 0.0
    %v289 = vand.u32 %v236, 4294901760
    %290 = vmatpush1.msra.mxu0 %v289
    %291 = vmatprep.subr.mxu0 0.0
    %v292 = vand.u32 %v235, 4294901760
    %293 = vmatpush1.msra.mxu0 %v292
    %294 = vmatprep.subr.mxu0 0.0
    %v295 = vand.u32 %v234, 4294901760
    %296 = vmatpush1.msra.mxu0 %v295
    %297 = vmatprep.subr.mxu0 0.0
    %v298 = vand.u32 %v233, 4294901760
    %299 = vmatpush1.msra.mxu0 %v298
    %300 = vmatprep.subr.mxu0 0.0
    %v301 = vand.u32 %v232, 4294901760
    %302 = vmatpush1.msra.mxu0 %v301
    %303 = vmatprep.subr.mxu0 0.0
    %304 = vmatpush2.msra.mxu0 0.0
    %305 = vmatprep.subr.mxu0 0.0
    %306 = vmatpush2.msra.mxu0 0.0
    %307 = vmatprep.subr.mxu0 0.0
    %308 = vmatpush2.msra.mxu0 0.0
    %309 = vmatprep.subr.mxu0 0.0
    %310 = vmatpush2.msra.mxu0 0.0
    %311 = vmatprep.subr.mxu0 0.0
    %312 = vmatpush2.msra.mxu0 0.0
    %313 = vmatprep.subr.mxu0 0.0
    %314 = vmatpush2.msra.mxu0 0.0
    %315 = vmatprep.subr.mxu0 0.0
    %316 = vmatpush2.msra.mxu0 0.0
    %317 = vmatprep.subr.mxu0 0.0
    %318 = vmatpush2.msra.mxu0 0.0
    %319 = vmatprep.subr.mxu0 0.0
    %320 = vmatpush2.msra.mxu0 0.0
    %321 = vmatprep.subr.mxu0 0.0
    %322 = vmatpush2.msra.mxu0 0.0
    %323 = vmatprep.subr.mxu0 0.0
    %324 = vmatpush2.msra.mxu0 0.0
    %325 = vmatprep.subr.mxu0 0.0
    %326 = vmatpush2.msra.mxu0 0.0
    %327 = vmatprep.subr.mxu0 0.0
    %328 = vmatpush2.msra.mxu0 0.0
    %329 = vmatprep.subr.mxu0 0.0
    %330 = vmatpush2.msra.mxu0 0.0
    %331 = vmatprep.subr.mxu0 0.0
    %332 = vmatpush2.msra.mxu0 0.0
    %333 = vmatprep.subr.mxu0 0.0
    %334 = vmatpush2.msra.mxu0 0.0
    %335 = vmatprep.mubr.f32.mxu0 0.0
    %v336 = vand.u32 %v230, 4294901760
    %v337 = vsub.f32 %v230, %v336
    %v338 = vand.u32 %v337, 4294901760
    %v339 = vsub.f32 %v337, %v338
    %v340 = vand.u32 %v339, 4294901760
    %341 = vmatmul.mubr.f32.gmra.mxu0 %v340
    %v342 = vpop.f32.mrf.mxu0
    %v343 = vadd.f32 %v253, %v342
    %v344 = vpop.f32.mrf.mxu0
    %345 = vmatprep.mubr.f32.mxu0 0.0
    %v346 = vand.u32 %v231, 4294901760
    %v347 = vsub.f32 %v231, %v346
    %v348 = vand.u32 %v347, 4294901760
    %v349 = vsub.f32 %v347, %v348
    %v350 = vand.u32 %v349, 4294901760
    %351 = vmatmul.mubr.f32.gmra.mxu0 %v350
    %v352 = vpop.f32.mrf.mxu0
    %v353 = vadd.f32 %v253, %v352
    %v354 = vpop.f32.mrf.mxu0
    %355 = vdwg.mxu0
    %356 = vmatprep.subr.mxu0 0.0
    %v357 = vand.u32 %v247, 4294901760
    %v358 = vsub.f32 %v247, %v357
    %v359 = vand.u32 %v358, 4294901760
    %v360 = vsub.f32 %v358, %v359
    %v361 = vand.u32 %v360, 4294901760
    %362 = vmatpush1.msra.mxu0 %v361
    %363 = vmatprep.subr.mxu0 0.0
    %v364 = vand.u32 %v246, 4294901760
    %v365 = vsub.f32 %v246, %v364
    %v366 = vand.u32 %v365, 4294901760
    %v367 = vsub.f32 %v365, %v366
    %v368 = vand.u32 %v367, 4294901760
    %369 = vmatpush1.msra.mxu0 %v368
    %370 = vmatprep.subr.mxu0 0.0
    %v371 = vand.u32 %v245, 4294901760
    %v372 = vsub.f32 %v245, %v371
    %v373 = vand.u32 %v372, 4294901760
    %v374 = vsub.f32 %v372, %v373
    %v375 = vand.u32 %v374, 4294901760
    %376 = vmatpush1.msra.mxu0 %v375
    %377 = vmatprep.subr.mxu0 0.0
    %v378 = vand.u32 %v244, 4294901760
    %v379 = vsub.f32 %v244, %v378
    %v380 = vand.u32 %v379, 4294901760
    %v381 = vsub.f32 %v379, %v380
    %v382 = vand.u32 %v381, 4294901760
    %383 = vmatpush1.msra.mxu0 %v382
    %384 = vmatprep.subr.mxu0 0.0
    %v385 = vand.u32 %v243, 4294901760
    %v386 = vsub.f32 %v243, %v385
    %v387 = vand.u32 %v386, 4294901760
    %v388 = vsub.f32 %v386, %v387
    %v389 = vand.u32 %v388, 4294901760
    %390 = vmatpush1.msra.mxu0 %v389
    %391 = vmatprep.subr.mxu0 0.0
    %v392 = vand.u32 %v242, 4294901760
    %v393 = vsub.f32 %v242, %v392
    %v394 = vand.u32 %v393, 4294901760
    %v395 = vsub.f32 %v393, %v394
    %v396 = vand.u32 %v395, 4294901760
    %397 = vmatpush1.msra.mxu0 %v396
    %398 = vmatprep.subr.mxu0 0.0
    %v399 = vand.u32 %v241, 4294901760
    %v400 = vsub.f32 %v241, %v399
    %v401 = vand.u32 %v400, 4294901760
    %v402 = vsub.f32 %v400, %v401
    %v403 = vand.u32 %v402, 4294901760
    %404 = vmatpush1.msra.mxu0 %v403
    %405 = vmatprep.subr.mxu0 0.0
    %v406 = vand.u32 %v240, 4294901760
    %v407 = vsub.f32 %v240, %v406
    %v408 = vand.u32 %v407, 4294901760
    %v409 = vsub.f32 %v407, %v408
    %v410 = vand.u32 %v409, 4294901760
    %411 = vmatpush1.msra.mxu0 %v410
    %412 = vmatprep.subr.mxu0 0.0
    %v413 = vand.u32 %v239, 4294901760
    %v414 = vsub.f32 %v239, %v413
    %v415 = vand.u32 %v414, 4294901760
    %v416 = vsub.f32 %v414, %v415
    %v417 = vand.u32 %v416, 4294901760
    %418 = vmatpush1.msra.mxu0 %v417
    %419 = vmatprep.subr.mxu0 0.0
    %v420 = vand.u32 %v238, 4294901760
    %v421 = vsub.f32 %v238, %v420
    %v422 = vand.u32 %v421, 4294901760
    %v423 = vsub.f32 %v421, %v422
    %v424 = vand.u32 %v423, 4294901760
    %425 = vmatpush1.msra.mxu0 %v424
    %426 = vmatprep.subr.mxu0 0.0
    %v427 = vand.u32 %v237, 4294901760
    %v428 = vsub.f32 %v237, %v427
    %v429 = vand.u32 %v428, 4294901760
    %v430 = vsub.f32 %v428, %v429
    %v431 = vand.u32 %v430, 4294901760
    %432 = vmatpush1.msra.mxu0 %v431
    %433 = vmatprep.subr.mxu0 0.0
    %v434 = vand.u32 %v236, 4294901760
    %v435 = vsub.f32 %v236, %v434
    %v436 = vand.u32 %v435, 4294901760
    %v437 = vsub.f32 %v435, %v436
    %v438 = vand.u32 %v437, 4294901760
    %439 = vmatpush1.msra.mxu0 %v438
    %440 = vmatprep.subr.mxu0 0.0
    %v441 = vand.u32 %v235, 4294901760
    %v442 = vsub.f32 %v235, %v441
    %v443 = vand.u32 %v442, 4294901760
    %v444 = vsub.f32 %v442, %v443
    %v445 = vand.u32 %v444, 4294901760
    %446 = vmatpush1.msra.mxu0 %v445
    %447 = vmatprep.subr.mxu0 0.0
    %v448 = vand.u32 %v234, 4294901760
    %v449 = vsub.f32 %v234, %v448
    %v450 = vand.u32 %v449, 4294901760
    %v451 = vsub.f32 %v449, %v450
    %v452 = vand.u32 %v451, 4294901760
    %453 = vmatpush1.msra.mxu0 %v452
    %454 = vmatprep.subr.mxu0 0.0
    %v455 = vand.u32 %v233, 4294901760
    %v456 = vsub.f32 %v233, %v455
    %v457 = vand.u32 %v456, 4294901760
    %v458 = vsub.f32 %v456, %v457
    %v459 = vand.u32 %v458, 4294901760
    %460 = vmatpush1.msra.mxu0 %v459
    %461 = vmatprep.subr.mxu0 0.0
    %v462 = vand.u32 %v232, 4294901760
    %v463 = vsub.f32 %v232, %v462
    %v464 = vand.u32 %v463, 4294901760
    %v465 = vsub.f32 %v463, %v464
    %v466 = vand.u32 %v465, 4294901760
    %467 = vmatpush1.msra.mxu0 %v466
    %468 = vmatprep.subr.mxu0 0.0
    %469 = vmatpush2.msra.mxu0 0.0
    %470 = vmatprep.subr.mxu0 0.0
    %471 = vmatpush2.msra.mxu0 0.0
    %472 = vmatprep.subr.mxu0 0.0
    %473 = vmatpush2.msra.mxu0 0.0
    %474 = vmatprep.subr.mxu0 0.0
    %475 = vmatpush2.msra.mxu0 0.0
    %476 = vmatprep.subr.mxu0 0.0
    %477 = vmatpush2.msra.mxu0 0.0
    %478 = vmatprep.subr.mxu0 0.0
    %479 = vmatpush2.msra.mxu0 0.0
    %480 = vmatprep.subr.mxu0 0.0
    %481 = vmatpush2.msra.mxu0 0.0
    %482 = vmatprep.subr.mxu0 0.0
    %483 = vmatpush2.msra.mxu0 0.0
    %484 = vmatprep.subr.mxu0 0.0
    %485 = vmatpush2.msra.mxu0 0.0
    %486 = vmatprep.subr.mxu0 0.0
    %487 = vmatpush2.msra.mxu0 0.0
    %488 = vmatprep.subr.mxu0 0.0
    %489 = vmatpush2.msra.mxu0 0.0
    %490 = vmatprep.subr.mxu0 0.0
    %491 = vmatpush2.msra.mxu0 0.0
    %492 = vmatprep.subr.mxu0 0.0
    %493 = vmatpush2.msra.mxu0 0.0
    %494 = vmatprep.subr.mxu0 0.0
    %495 = vmatpush2.msra.mxu0 0.0
    %496 = vmatprep.subr.mxu0 0.0
    %497 = vmatpush2.msra.mxu0 0.0
    %498 = vmatprep.subr.mxu0 0.0
    %499 = vmatpush2.msra.mxu0 0.0
    %500 = vmatprep.mubr.f32.mxu0 0.0
    %v501 = vand.u32 %v230, 4294901760
    %502 = vmatmul.mubr.f32.gmra.mxu0 %v501
    %v503 = vpop.f32.mrf.mxu0
    %v504 = vadd.f32 %v343, %v503
    %v505 = vpop.f32.mrf.mxu0
    %506 = vmatprep.mubr.f32.mxu0 0.0
    %v507 = vand.u32 %v231, 4294901760
    %508 = vmatmul.mubr.f32.gmra.mxu0 %v507
    %v509 = vpop.f32.mrf.mxu0
    %v510 = vadd.f32 %v353, %v509
    %v511 = vpop.f32.mrf.mxu0
    %512 = vdwg.mxu0
    %513 = vmatprep.subr.mxu0 0.0
    %v514 = vand.u32 %v247, 4294901760
    %v515 = vsub.f32 %v247, %v514
    %516 = vmatpush1.msra.mxu0 %v515
    %517 = vmatprep.subr.mxu0 0.0
    %v518 = vand.u32 %v246, 4294901760
    %v519 = vsub.f32 %v246, %v518
    %520 = vmatpush1.msra.mxu0 %v519
    %521 = vmatprep.subr.mxu0 0.0
    %v522 = vand.u32 %v245, 4294901760
    %v523 = vsub.f32 %v245, %v522
    %524 = vmatpush1.msra.mxu0 %v523
    %525 = vmatprep.subr.mxu0 0.0
    %v526 = vand.u32 %v244, 4294901760
    %v527 = vsub.f32 %v244, %v526
    %528 = vmatpush1.msra.mxu0 %v527
    %529 = vmatprep.subr.mxu0 0.0
    %v530 = vand.u32 %v243, 4294901760
    %v531 = vsub.f32 %v243, %v530
    %532 = vmatpush1.msra.mxu0 %v531
    %533 = vmatprep.subr.mxu0 0.0
    %v534 = vand.u32 %v242, 4294901760
    %v535 = vsub.f32 %v242, %v534
    %536 = vmatpush1.msra.mxu0 %v535
    %537 = vmatprep.subr.mxu0 0.0
    %v538 = vand.u32 %v241, 4294901760
    %v539 = vsub.f32 %v241, %v538
    %540 = vmatpush1.msra.mxu0 %v539
    %541 = vmatprep.subr.mxu0 0.0
    %v542 = vand.u32 %v240, 4294901760
    %v543 = vsub.f32 %v240, %v542
    %544 = vmatpush1.msra.mxu0 %v543
    %545 = vmatprep.subr.mxu0 0.0
    %v546 = vand.u32 %v239, 4294901760
    %v547 = vsub.f32 %v239, %v546
    %548 = vmatpush1.msra.mxu0 %v547
    %549 = vmatprep.subr.mxu0 0.0
    %v550 = vand.u32 %v238, 4294901760
    %v551 = vsub.f32 %v238, %v550
    %552 = vmatpush1.msra.mxu0 %v551
    %553 = vmatprep.subr.mxu0 0.0
    %v554 = vand.u32 %v237, 4294901760
    %v555 = vsub.f32 %v237, %v554
    %556 = vmatpush1.msra.mxu0 %v555
    %557 = vmatprep.subr.mxu0 0.0
    %v558 = vand.u32 %v236, 4294901760
    %v559 = vsub.f32 %v236, %v558
    %560 = vmatpush1.msra.mxu0 %v559
    %561 = vmatprep.subr.mxu0 0.0
    %v562 = vand.u32 %v235, 4294901760
    %v563 = vsub.f32 %v235, %v562
    %564 = vmatpush1.msra.mxu0 %v563
    %565 = vmatprep.subr.mxu0 0.0
    %v566 = vand.u32 %v234, 4294901760
    %v567 = vsub.f32 %v234, %v566
    %568 = vmatpush1.msra.mxu0 %v567
    %569 = vmatprep.subr.mxu0 0.0
    %v570 = vand.u32 %v233, 4294901760
    %v571 = vsub.f32 %v233, %v570
    %572 = vmatpush1.msra.mxu0 %v571
    %573 = vmatprep.subr.mxu0 0.0
    %v574 = vand.u32 %v232, 4294901760
    %v575 = vsub.f32 %v232, %v574
    %576 = vmatpush1.msra.mxu0 %v575
    %577 = vmatprep.subr.mxu0 0.0
    %578 = vmatpush2.msra.mxu0 0.0
    %579 = vmatprep.subr.mxu0 0.0
    %580 = vmatpush2.msra.mxu0 0.0
    %581 = vmatprep.subr.mxu0 0.0
    %582 = vmatpush2.msra.mxu0 0.0
    %583 = vmatprep.subr.mxu0 0.0
    %584 = vmatpush2.msra.mxu0 0.0
    %585 = vmatprep.subr.mxu0 0.0
    %586 = vmatpush2.msra.mxu0 0.0
    %587 = vmatprep.subr.mxu0 0.0
    %588 = vmatpush2.msra.mxu0 0.0
    %589 = vmatprep.subr.mxu0 0.0
    %590 = vmatpush2.msra.mxu0 0.0
    %591 = vmatprep.subr.mxu0 0.0
    %592 = vmatpush2.msra.mxu0 0.0
    %593 = vmatprep.subr.mxu0 0.0
    %594 = vmatpush2.msra.mxu0 0.0
    %595 = vmatprep.subr.mxu0 0.0
    %596 = vmatpush2.msra.mxu0 0.0
    %597 = vmatprep.subr.mxu0 0.0
    %598 = vmatpush2.msra.mxu0 0.0
    %599 = vmatprep.subr.mxu0 0.0
    %600 = vmatpush2.msra.mxu0 0.0
    %601 = vmatprep.subr.mxu0 0.0
    %602 = vmatpush2.msra.mxu0 0.0
    %603 = vmatprep.subr.mxu0 0.0
    %604 = vmatpush2.msra.mxu0 0.0
    %605 = vmatprep.subr.mxu0 0.0
    %606 = vmatpush2.msra.mxu0 0.0
    %607 = vmatprep.subr.mxu0 0.0
    %608 = vmatpush2.msra.mxu0 0.0
    %609 = vmatprep.mubr.f32.mxu0 0.0
    %v610 = vand.u32 %v230, 4294901760
    %v611 = vsub.f32 %v230, %v610
    %612 = vmatmul.mubr.f32.gmra.mxu0 %v611
    %v613 = vpop.f32.mrf.mxu0
    %v614 = vadd.f32 %v504, %v613
    %v615 = vpop.f32.mrf.mxu0
    %616 = vmatprep.mubr.f32.mxu0 0.0
    %v617 = vand.u32 %v231, 4294901760
    %v618 = vsub.f32 %v231, %v617
    %619 = vmatmul.mubr.f32.gmra.mxu0 %v618
    %v620 = vpop.f32.mrf.mxu0
    %v621 = vadd.f32 %v510, %v620
    %v622 = vpop.f32.mrf.mxu0
    %623 = vdwg.mxu0
    %624 = vmatprep.subr.mxu0 0.0
    %v625 = vand.u32 %v247, 4294901760
    %626 = vmatpush1.msra.mxu0 %v625
    %627 = vmatprep.subr.mxu0 0.0
    %v628 = vand.u32 %v246, 4294901760
    %629 = vmatpush1.msra.mxu0 %v628
    %630 = vmatprep.subr.mxu0 0.0
    %v631 = vand.u32 %v245, 4294901760
    %632 = vmatpush1.msra.mxu0 %v631
    %633 = vmatprep.subr.mxu0 0.0
    %v634 = vand.u32 %v244, 4294901760
    %635 = vmatpush1.msra.mxu0 %v634
    %636 = vmatprep.subr.mxu0 0.0
    %v637 = vand.u32 %v243, 4294901760
    %638 = vmatpush1.msra.mxu0 %v637
    %639 = vmatprep.subr.mxu0 0.0
    %v640 = vand.u32 %v242, 4294901760
    %641 = vmatpush1.msra.mxu0 %v640
    %642 = vmatprep.subr.mxu0 0.0
    %v643 = vand.u32 %v241, 4294901760
    %644 = vmatpush1.msra.mxu0 %v643
    %645 = vmatprep.subr.mxu0 0.0
    %v646 = vand.u32 %v240, 4294901760
    %647 = vmatpush1.msra.mxu0 %v646
    %648 = vmatprep.subr.mxu0 0.0
    %v649 = vand.u32 %v239, 4294901760
    %650 = vmatpush1.msra.mxu0 %v649
    %651 = vmatprep.subr.mxu0 0.0
    %v652 = vand.u32 %v238, 4294901760
    %653 = vmatpush1.msra.mxu0 %v652
    %654 = vmatprep.subr.mxu0 0.0
    %v655 = vand.u32 %v237, 4294901760
    %656 = vmatpush1.msra.mxu0 %v655
    %657 = vmatprep.subr.mxu0 0.0
    %v658 = vand.u32 %v236, 4294901760
    %659 = vmatpush1.msra.mxu0 %v658
    %660 = vmatprep.subr.mxu0 0.0
    %v661 = vand.u32 %v235, 4294901760
    %662 = vmatpush1.msra.mxu0 %v661
    %663 = vmatprep.subr.mxu0 0.0
    %v664 = vand.u32 %v234, 4294901760
    %665 = vmatpush1.msra.mxu0 %v664
    %666 = vmatprep.subr.mxu0 0.0
    %v667 = vand.u32 %v233, 4294901760
    %668 = vmatpush1.msra.mxu0 %v667
    %669 = vmatprep.subr.mxu0 0.0
    %v670 = vand.u32 %v232, 4294901760
    %671 = vmatpush1.msra.mxu0 %v670
    %672 = vmatprep.subr.mxu0 0.0
    %673 = vmatpush2.msra.mxu0 0.0
    %674 = vmatprep.subr.mxu0 0.0
    %675 = vmatpush2.msra.mxu0 0.0
    %676 = vmatprep.subr.mxu0 0.0
    %677 = vmatpush2.msra.mxu0 0.0
    %678 = vmatprep.subr.mxu0 0.0
    %679 = vmatpush2.msra.mxu0 0.0
    %680 = vmatprep.subr.mxu0 0.0
    %681 = vmatpush2.msra.mxu0 0.0
    %682 = vmatprep.subr.mxu0 0.0
    %683 = vmatpush2.msra.mxu0 0.0
    %684 = vmatprep.subr.mxu0 0.0
    %685 = vmatpush2.msra.mxu0 0.0
    %686 = vmatprep.subr.mxu0 0.0
    %687 = vmatpush2.msra.mxu0 0.0
    %688 = vmatprep.subr.mxu0 0.0
    %689 = vmatpush2.msra.mxu0 0.0
    %690 = vmatprep.subr.mxu0 0.0
    %691 = vmatpush2.msra.mxu0 0.0
    %692 = vmatprep.subr.mxu0 0.0
    %693 = vmatpush2.msra.mxu0 0.0
    %694 = vmatprep.subr.mxu0 0.0
    %695 = vmatpush2.msra.mxu0 0.0
    %696 = vmatprep.subr.mxu0 0.0
    %697 = vmatpush2.msra.mxu0 0.0
    %698 = vmatprep.subr.mxu0 0.0
    %699 = vmatpush2.msra.mxu0 0.0
    %700 = vmatprep.subr.mxu0 0.0
    %701 = vmatpush2.msra.mxu0 0.0
    %702 = vmatprep.subr.mxu0 0.0
    %703 = vmatpush2.msra.mxu0 0.0
    %704 = vmatprep.mubr.f32.mxu0 0.0
    %v705 = vand.u32 %v230, 4294901760
    %v706 = vsub.f32 %v230, %v705
    %v707 = vand.u32 %v706, 4294901760
    %708 = vmatmul.mubr.f32.gmra.mxu0 %v707
    %v709 = vpop.f32.mrf.mxu0
    %v710 = vadd.f32 %v614, %v709
    %v711 = vpop.f32.mrf.mxu0
    %712 = vmatprep.mubr.f32.mxu0 0.0
    %v713 = vand.u32 %v231, 4294901760
    %v714 = vsub.f32 %v231, %v713
    %v715 = vand.u32 %v714, 4294901760
    %716 = vmatmul.mubr.f32.gmra.mxu0 %v715
    %v717 = vpop.f32.mrf.mxu0
    %v718 = vadd.f32 %v621, %v717
    %v719 = vpop.f32.mrf.mxu0
    %720 = vdwg.mxu0
    %721 = vmatprep.subr.mxu0 0.0
    %v722 = vand.u32 %v247, 4294901760
    %v723 = vsub.f32 %v247, %v722
    %v724 = vand.u32 %v723, 4294901760
    %725 = vmatpush1.msra.mxu0 %v724
    %726 = vmatprep.subr.mxu0 0.0
    %v727 = vand.u32 %v246, 4294901760
    %v728 = vsub.f32 %v246, %v727
    %v729 = vand.u32 %v728, 4294901760
    %730 = vmatpush1.msra.mxu0 %v729
    %731 = vmatprep.subr.mxu0 0.0
    %v732 = vand.u32 %v245, 4294901760
    %v733 = vsub.f32 %v245, %v732
    %v734 = vand.u32 %v733, 4294901760
    %735 = vmatpush1.msra.mxu0 %v734
    %736 = vmatprep.subr.mxu0 0.0
    %v737 = vand.u32 %v244, 4294901760
    %v738 = vsub.f32 %v244, %v737
    %v739 = vand.u32 %v738, 4294901760
    %740 = vmatpush1.msra.mxu0 %v739
    %741 = vmatprep.subr.mxu0 0.0
    %v742 = vand.u32 %v243, 4294901760
    %v743 = vsub.f32 %v243, %v742
    %v744 = vand.u32 %v743, 4294901760
    %745 = vmatpush1.msra.mxu0 %v744
    %746 = vmatprep.subr.mxu0 0.0
    %v747 = vand.u32 %v242, 4294901760
    %v748 = vsub.f32 %v242, %v747
    %v749 = vand.u32 %v748, 4294901760
    %750 = vmatpush1.msra.mxu0 %v749
    %751 = vmatprep.subr.mxu0 0.0
    %v752 = vand.u32 %v241, 4294901760
    %v753 = vsub.f32 %v241, %v752
    %v754 = vand.u32 %v753, 4294901760
    %755 = vmatpush1.msra.mxu0 %v754
    %756 = vmatprep.subr.mxu0 0.0
    %v757 = vand.u32 %v240, 4294901760
    %v758 = vsub.f32 %v240, %v757
    %v759 = vand.u32 %v758, 4294901760
    %760 = vmatpush1.msra.mxu0 %v759
    %761 = vmatprep.subr.mxu0 0.0
    %v762 = vand.u32 %v239, 4294901760
    %v763 = vsub.f32 %v239, %v762
    %v764 = vand.u32 %v763, 4294901760
    %765 = vmatpush1.msra.mxu0 %v764
    %766 = vmatprep.subr.mxu0 0.0
    %v767 = vand.u32 %v238, 4294901760
    %v768 = vsub.f32 %v238, %v767
    %v769 = vand.u32 %v768, 4294901760
    %770 = vmatpush1.msra.mxu0 %v769
    %771 = vmatprep.subr.mxu0 0.0
    %v772 = vand.u32 %v237, 4294901760
    %v773 = vsub.f32 %v237, %v772
    %v774 = vand.u32 %v773, 4294901760
    %775 = vmatpush1.msra.mxu0 %v774
    %776 = vmatprep.subr.mxu0 0.0
    %v777 = vand.u32 %v236, 4294901760
    %v778 = vsub.f32 %v236, %v777
    %v779 = vand.u32 %v778, 4294901760
    %780 = vmatpush1.msra.mxu0 %v779
    %781 = vmatprep.subr.mxu0 0.0
    %v782 = vand.u32 %v235, 4294901760
    %v783 = vsub.f32 %v235, %v782
    %v784 = vand.u32 %v783, 4294901760
    %785 = vmatpush1.msra.mxu0 %v784
    %786 = vmatprep.subr.mxu0 0.0
    %v787 = vand.u32 %v234, 4294901760
    %v788 = vsub.f32 %v234, %v787
    %v789 = vand.u32 %v788, 4294901760
    %790 = vmatpush1.msra.mxu0 %v789
    %791 = vmatprep.subr.mxu0 0.0
    %v792 = vand.u32 %v233, 4294901760
    %v793 = vsub.f32 %v233, %v792
    %v794 = vand.u32 %v793, 4294901760
    %795 = vmatpush1.msra.mxu0 %v794
    %796 = vmatprep.subr.mxu0 0.0
    %v797 = vand.u32 %v232, 4294901760
    %v798 = vsub.f32 %v232, %v797
    %v799 = vand.u32 %v798, 4294901760
    %800 = vmatpush1.msra.mxu0 %v799
    %801 = vmatprep.subr.mxu0 0.0
    %802 = vmatpush2.msra.mxu0 0.0
    %803 = vmatprep.subr.mxu0 0.0
    %804 = vmatpush2.msra.mxu0 0.0
    %805 = vmatprep.subr.mxu0 0.0
    %806 = vmatpush2.msra.mxu0 0.0
    %807 = vmatprep.subr.mxu0 0.0
    %808 = vmatpush2.msra.mxu0 0.0
    %809 = vmatprep.subr.mxu0 0.0
    %810 = vmatpush2.msra.mxu0 0.0
    %811 = vmatprep.subr.mxu0 0.0
    %812 = vmatpush2.msra.mxu0 0.0
    %813 = vmatprep.subr.mxu0 0.0
    %814 = vmatpush2.msra.mxu0 0.0
    %815 = vmatprep.subr.mxu0 0.0
    %816 = vmatpush2.msra.mxu0 0.0
    %817 = vmatprep.subr.mxu0 0.0
    %818 = vmatpush2.msra.mxu0 0.0
    %819 = vmatprep.subr.mxu0 0.0
    %820 = vmatpush2.msra.mxu0 0.0
    %821 = vmatprep.subr.mxu0 0.0
    %822 = vmatpush2.msra.mxu0 0.0
    %823 = vmatprep.subr.mxu0 0.0
    %824 = vmatpush2.msra.mxu0 0.0
    %825 = vmatprep.subr.mxu0 0.0
    %826 = vmatpush2.msra.mxu0 0.0
    %827 = vmatprep.subr.mxu0 0.0
    %828 = vmatpush2.msra.mxu0 0.0
    %829 = vmatprep.subr.mxu0 0.0
    %830 = vmatpush2.msra.mxu0 0.0
    %831 = vmatprep.subr.mxu0 0.0
    %832 = vmatpush2.msra.mxu0 0.0
    %833 = vmatprep.mubr.f32.mxu0 0.0
    %v834 = vand.u32 %v230, 4294901760
    %835 = vmatmul.mubr.f32.gmra.mxu0 %v834
    %v836 = vpop.f32.mrf.mxu0
    %v837 = vadd.f32 %v710, %v836
    %v838 = vpop.f32.mrf.mxu0
    %839 = vmatprep.mubr.f32.mxu0 0.0
    %v840 = vand.u32 %v231, 4294901760
    %841 = vmatmul.mubr.f32.gmra.mxu0 %v840
    %v842 = vpop.f32.mrf.mxu0
    %v843 = vadd.f32 %v718, %v842
    %v844 = vpop.f32.mrf.mxu0
    %845 = vdwg.mxu0
    %846 = vmatprep.subr.mxu0 0.0
    %v847 = vand.u32 %v247, 4294901760
    %848 = vmatpush1.msra.mxu0 %v847
    %849 = vmatprep.subr.mxu0 0.0
    %v850 = vand.u32 %v246, 4294901760
    %851 = vmatpush1.msra.mxu0 %v850
    %852 = vmatprep.subr.mxu0 0.0
    %v853 = vand.u32 %v245, 4294901760
    %854 = vmatpush1.msra.mxu0 %v853
    %855 = vmatprep.subr.mxu0 0.0
    %v856 = vand.u32 %v244, 4294901760
    %857 = vmatpush1.msra.mxu0 %v856
    %858 = vmatprep.subr.mxu0 0.0
    %v859 = vand.u32 %v243, 4294901760
    %860 = vmatpush1.msra.mxu0 %v859
    %861 = vmatprep.subr.mxu0 0.0
    %v862 = vand.u32 %v242, 4294901760
    %863 = vmatpush1.msra.mxu0 %v862
    %864 = vmatprep.subr.mxu0 0.0
    %v865 = vand.u32 %v241, 4294901760
    %866 = vmatpush1.msra.mxu0 %v865
    %867 = vmatprep.subr.mxu0 0.0
    %v868 = vand.u32 %v240, 4294901760
    %869 = vmatpush1.msra.mxu0 %v868
    %870 = vmatprep.subr.mxu0 0.0
    %v871 = vand.u32 %v239, 4294901760
    %872 = vmatpush1.msra.mxu0 %v871
    %873 = vmatprep.subr.mxu0 0.0
    %v874 = vand.u32 %v238, 4294901760
    %875 = vmatpush1.msra.mxu0 %v874
    %876 = vmatprep.subr.mxu0 0.0
    %v877 = vand.u32 %v237, 4294901760
    %878 = vmatpush1.msra.mxu0 %v877
    %879 = vmatprep.subr.mxu0 0.0
    %v880 = vand.u32 %v236, 4294901760
    %881 = vmatpush1.msra.mxu0 %v880
    %882 = vmatprep.subr.mxu0 0.0
    %v883 = vand.u32 %v235, 4294901760
    %884 = vmatpush1.msra.mxu0 %v883
    %885 = vmatprep.subr.mxu0 0.0
    %v886 = vand.u32 %v234, 4294901760
    %887 = vmatpush1.msra.mxu0 %v886
    %888 = vmatprep.subr.mxu0 0.0
    %v889 = vand.u32 %v233, 4294901760
    %890 = vmatpush1.msra.mxu0 %v889
    %891 = vmatprep.subr.mxu0 0.0
    %v892 = vand.u32 %v232, 4294901760
    %893 = vmatpush1.msra.mxu0 %v892
    %894 = vmatprep.subr.mxu0 0.0
    %895 = vmatpush2.msra.mxu0 0.0
    %896 = vmatprep.subr.mxu0 0.0
    %897 = vmatpush2.msra.mxu0 0.0
    %898 = vmatprep.subr.mxu0 0.0
    %899 = vmatpush2.msra.mxu0 0.0
    %900 = vmatprep.subr.mxu0 0.0
    %901 = vmatpush2.msra.mxu0 0.0
    %902 = vmatprep.subr.mxu0 0.0
    %903 = vmatpush2.msra.mxu0 0.0
    %904 = vmatprep.subr.mxu0 0.0
    %905 = vmatpush2.msra.mxu0 0.0
    %906 = vmatprep.subr.mxu0 0.0
    %907 = vmatpush2.msra.mxu0 0.0
    %908 = vmatprep.subr.mxu0 0.0
    %909 = vmatpush2.msra.mxu0 0.0
    %910 = vmatprep.subr.mxu0 0.0
    %911 = vmatpush2.msra.mxu0 0.0
    %912 = vmatprep.subr.mxu0 0.0
    %913 = vmatpush2.msra.mxu0 0.0
    %914 = vmatprep.subr.mxu0 0.0
    %915 = vmatpush2.msra.mxu0 0.0
    %916 = vmatprep.subr.mxu0 0.0
    %917 = vmatpush2.msra.mxu0 0.0
    %918 = vmatprep.subr.mxu0 0.0
    %919 = vmatpush2.msra.mxu0 0.0
    %920 = vmatprep.subr.mxu0 0.0
    %921 = vmatpush2.msra.mxu0 0.0
    %922 = vmatprep.subr.mxu0 0.0
    %923 = vmatpush2.msra.mxu0 0.0
    %924 = vmatprep.subr.mxu0 0.0
    %925 = vmatpush2.msra.mxu0 0.0
    %926 = vmatprep.mubr.f32.mxu0 0.0
    %v927 = vand.u32 %v230, 4294901760
    %928 = vmatmul.mubr.f32.gmra.mxu0 %v927
    %v929 = vpop.f32.mrf.mxu0
    %v930 = vadd.f32 %v837, %v929
    %v931 = vpop.f32.mrf.mxu0
    %932 = vmatprep.mubr.f32.mxu0 0.0
    %v933 = vand.u32 %v231, 4294901760
    %934 = vmatmul.mubr.f32.gmra.mxu0 %v933
    %v935 = vpop.f32.mrf.mxu0
    %v936 = vadd.f32 %v843, %v935
    %v937 = vpop.f32.mrf.mxu0
    %938 = vdwg.mxu0
    %v939 = vld [vmem:[%s9] sm:$0x1]
    %v940 = vld [vmem:[%s10] sm:$0x1]
    %941 = vadd.xlane.f32.xlu0 %v930
    %v942 = vpop.xlane.xlu0 %941
    %943 = vadd.xlane.f32.xlu0 %v936
    %v944 = vpop.xlane.xlu0 %943
    %v945 = vmul.f32 %v942, 0.03125
    %v946 = vmul.f32 %v944, 0.03125
    %v947 = vsub.f32 %v930, %v945
    %v948 = vsub.f32 %v936, %v946
    %v949 = vmul.f32 %v947, %v153
    %v950 = vmul.f32 %v948, %v153
    %v951 = vmul.f32 %v949, %v949
    %v952 = vmul.f32 %v950, %v950
    %953 = vadd.xlane.f32.xlu0 %v951
    %v954 = vpop.xlane.xlu0 %953
    %955 = vadd.xlane.f32.xlu0 %v952
    %v956 = vpop.xlane.xlu0 %955
    %v957 = vmul.f32 %v954, 0.03125
    %v958 = vmul.f32 %v956, 0.03125
    %v959 = vadd.f32 %v957, 1e-05
    %v960 = vadd.f32 %v958, 1e-05
    %v961 = vrsqrt.pop %v959
    %v962 = vrsqrt.pop %v960
    %v963 = vmul.f32 %v949, %v961
    %v964 = vmul.f32 %v950, %v962
    %v966 = vlaneseq
    %v967 = vshrl.u32 %v966, 7
    %v968 = vsub.s32 0, %v967
    %v969 = vrot.slane %v939, %v968
    %v971 = vmul.f32 %v963, %v969
    %v972 = vmul.f32 %v964, %v969
    %v974 = vlaneseq
    %v975 = vshrl.u32 %v974, 7
    %v976 = vsub.s32 0, %v975
    %v977 = vrot.slane %v940, %v976
    %v979 = vadd.f32 %v971, %v977
    %v980 = vadd.f32 %v972, %v977
    %v981 = vadd.f32 %v196, %v979
    %v982 = vadd.f32 %v197, %v980
    %983 = vst [vmem:[%s11] sm:$0xff] %v981
    %984 = vst [vmem:[%s11 + $0x8] sm:$0xff] %v982
  $region53: #{bioformer_encode_embs.1} parent=0 // pred_fallthru
    _
  // Predicated region
  $region54: #{bioformer_encode_embs.1} parent=0 // pred_check
    _
  $region55: #{bioformer_encode_embs.1} parent=0 // pred_check_branch
    %986 = sbr.rel (0) target = $region57
  $region56: #{bioformer_encode_embs.1} parent=0 // pred_region
    _
  $region57: #{bioformer_encode_embs.1} parent=0 // pred_fallthru
    _
  // Predicated region
  $region58: #{bioformer_encode_embs.1} parent=0 // pred_check
    _
  $region59: #{bioformer_encode_embs.1} parent=0 // pred_check_branch
    %988 = sbr.rel (0) target = $region61
  $region60: #{bioformer_encode_embs.1} parent=0 // pred_region
    _
  $region61: #{bioformer_encode_embs.1} parent=0 // pred_fallthru
    _

</llo_original>
